<compile_context>
chip_gen: v7x
topology: tpu7x:2x2x1
jax: 0.10.0
libtpu: 0.0.40
codegen_flags: <defaults>
</compile_context>

<pallas_src>
import jax
import jax.numpy as jnp
from jax.experimental import pallas as pl
from jax.experimental.pallas import tpu as pltpu

# Hyperparameters implied by MLPPolicy.__init__ (n_layers hidden tanh layers of
# width `size`, then a linear output layer of width ac_dim, plus logstd[ac_dim]).
OB_DIM = 16
AC_DIM = 8
N_LAYERS = 2
SIZE = 32

LANE = 128        # TPU lane width
MAX_TB = 1024     # per-step batch tile (lanes); multiple of 128


def _round_up(x, m):
    return ((x + m - 1) // m) * m


def _make_mean_kernel(size, ac_dim):
    """Transposed-layout MLP mean kernel: features on sublanes, batch on lanes."""

    def kernel(obs_ref, w0t_ref, w1t_ref, w2t_ref, bias_ref, mean_ref):
        x = obs_ref[...]                       # [ob_dim, tb]
        b = bias_ref[...]                      # [2*size + ac_dim, 1]
        b0 = b[:size, :]                       # [size, 1]
        b1 = b[size:2 * size, :]               # [size, 1]
        b2 = b[2 * size:2 * size + ac_dim, :]  # [ac_dim, 1]

        # Hidden layer 0: Linear + tanh   -> [size, tb]
        h = jnp.tanh(
            jnp.dot(w0t_ref[...], x, preferred_element_type=jnp.float32) + b0
        )
        # Hidden layer 1: Linear + tanh   -> [size, tb]
        h = jnp.tanh(
            jnp.dot(w1t_ref[...], h, preferred_element_type=jnp.float32) + b1
        )
        # Output layer: Linear (identity) -> [ac_dim, tb] Gaussian mean
        mean_ref[...] = (
            jnp.dot(w2t_ref[...], h, preferred_element_type=jnp.float32) + b2
        ).astype(mean_ref.dtype)
        # Matmuls stay f32: the kernel is DMA/store-bound at these sizes, and
        # f32 keeps exact agreement with the reference (bf16 would only matter
        # on v5e if a bundle dump showed the MXU slot binding).

    return kernel


@jax.jit
def mlp_policy_forward(obs, w0, b0, w1, b1, w2, b2, logstd):
    """Returns (mean [B, ac_dim], covariance [ac_dim, ac_dim])."""
    B, ob_dim = obs.shape
    size = w0.shape[1]
    ac_dim = w2.shape[1]

    # Batch tile (lane axis).  Small batches: one whole-batch step (tb == B is
    # always a legal lane block since it equals the full array dim).  Larger
    # batches: >= 2 steps (second v7x TensorCore participates), tile a multiple
    # of 128 and capped at MAX_TB so DMA of step i+1 overlaps compute of step i.
    if B <= 2 * LANE:
        tb = B
    else:
        tb = min(MAX_TB, _round_up(pl.cdiv(B, 2), LANE))
    grid = (pl.cdiv(B, tb),)

    # Transposed (lane-dense) parameter / activation layout.
    obs_t = obs.T                                   # [ob_dim, B]
    w0t = w0.T                                      # [size, ob_dim]
    w1t = w1.T                                      # [size, size]
    w2t = w2.T                                      # [ac_dim, size]
    biases = jnp.concatenate([b0, b1, b2]).reshape(2 * size + ac_dim, 1)

    mean_t = pl.pallas_call(
        _make_mean_kernel(size, ac_dim),
        out_shape=jax.ShapeDtypeStruct((ac_dim, B), jnp.float32),
        grid_spec=pltpu.PrefetchScalarGridSpec(
            num_scalar_prefetch=0,
            grid=grid,
            in_specs=[
                pl.BlockSpec((ob_dim, tb), lambda i: (0, i)),          # obs^T tile
                pl.BlockSpec((size, ob_dim), lambda i: (0, 0)),        # W0^T (grid-invariant)
                pl.BlockSpec((size, size), lambda i: (0, 0)),          # W1^T
                pl.BlockSpec((ac_dim, size), lambda i: (0, 0)),        # W2^T
                pl.BlockSpec((2 * size + ac_dim, 1), lambda i: (0, 0)),  # packed biases
            ],
            out_specs=pl.BlockSpec((ac_dim, tb), lambda i: (0, i)),
        ),
        compiler_params=pltpu.CompilerParams(
            # Batch tiles are fully independent (covariance is outside the
            # kernel) -> shard across TensorCores on v7x; neutral on v5e/v6e.
            dimension_semantics=("parallel",),
        ),
    )(obs_t, w0t, w1t, w2t, biases)

    mean = mean_t.T                                 # back to [B, ac_dim]

    # covariance_matrix = torch.diag(logstd.exp()) — batch-independent, plain JAX.
    cov = jnp.diag(jnp.exp(logstd))
    return mean, cov
    # TODO(synk): discrete Categorical branch and MultivariateNormal
    # sampling / log_prob are distribution-object concerns, not the forward
    # hot path; only (loc, covariance) are produced here.


def _init_params(key):
    """Deterministic synthetic parameters matching build_mlp shapes."""
    ks = jax.random.split(key, 6)
    w0 = jax.random.normal(ks[0], (OB_DIM, SIZE), jnp.float32) * 0.1
    b0 = jax.random.normal(ks[1], (SIZE,), jnp.float32) * 0.1
    w1 = jax.random.normal(ks[2], (SIZE, SIZE), jnp.float32) * 0.1
    b1 = jax.random.normal(ks[3], (SIZE,), jnp.float32) * 0.1
    w2 = jax.random.normal(ks[4], (SIZE, AC_DIM), jnp.float32) * 0.1
    b2 = jax.random.normal(ks[5], (AC_DIM,), jnp.float32) * 0.1
    logstd = jnp.zeros((AC_DIM,), jnp.float32)  # nn.Parameter(torch.zeros(ac_dim))
    return w0, b0, w1, b1, w2, b2, logstd


def _reference_forward(obs, w0, b0, w1, b1, w2, b2, logstd):
    h = jnp.tanh(obs @ w0 + b0)
    h = jnp.tanh(h @ w1 + b1)
    mean = h @ w2 + b2
    cov = jnp.diag(jnp.exp(logstd))
    return mean, cov


if __name__ == "__main__":
    key = jax.random.PRNGKey(0)
    k1, k2, k3, k_par = jax.random.split(key, 4)
    params = _init_params(k_par)

    # Small primary check (single whole-batch step, tb == B == 2).
    B = 2
    obs = jax.random.normal(k1, (B, OB_DIM), jnp.float32)
    mean, cov = mlp_policy_forward(obs, *params)
    jax.block_until_ready((mean, cov))
    ref_mean, ref_cov = _reference_forward(obs, *params)
    assert mean.shape == (B, AC_DIM) and cov.shape == (AC_DIM, AC_DIM)
    assert jnp.allclose(mean, ref_mean, atol=1e-5, rtol=1e-5)
    assert jnp.allclose(cov, ref_cov, atol=1e-6, rtol=1e-6)

    # Batch not a multiple of the lane width, still single step (tb == B == 37).
    B2 = 37
    obs2 = jax.random.normal(k2, (B2, OB_DIM), jnp.float32)
    mean2, cov2 = mlp_policy_forward(obs2, *params)
    jax.block_until_ready((mean2, cov2))
    ref_mean2, ref_cov2 = _reference_forward(obs2, *params)
    assert mean2.shape == (B2, AC_DIM)
    assert jnp.allclose(mean2, ref_mean2, atol=1e-5, rtol=1e-5)
    assert jnp.allclose(cov2, ref_cov2, atol=1e-6, rtol=1e-6)

    # Larger batch: exercises the multi-step grid (2 tiles of 256 lanes, last
    # one partial) — the path that shards across TensorCores on v7x.
    B3 = 300
    obs3 = jax.random.normal(k3, (B3, OB_DIM), jnp.float32)
    mean3, cov3 = mlp_policy_forward(obs3, *params)
    jax.block_until_ready((mean3, cov3))
    ref_mean3, _ = _reference_forward(obs3, *params)
    assert mean3.shape == (B3, AC_DIM)
    assert jnp.allclose(mean3, ref_mean3, atol=1e-5, rtol=1e-5)

    print("KERNEL_OK")
</pallas_src>

<mosaic_0001>
module attributes {stable_mosaic.version = 11 : i64} {
  func.func @kernel(%arg0: i32, %arg1: memref<16x2xf32, #tpu.memory_space<vmem>>, %arg2: memref<32x16xf32, #tpu.memory_space<vmem>>, %arg3: memref<32x32xf32, #tpu.memory_space<vmem>>, %arg4: memref<8x32xf32, #tpu.memory_space<vmem>>, %arg5: memref<72x1xf32, #tpu.memory_space<vmem>>, %arg6: memref<8x2xf32, #tpu.memory_space<vmem>>) attributes {dimension_semantics = [#tpu.dimension_semantics<parallel>], iteration_bounds = array<i64: 1>, scalar_prefetch = 0 : i64, scratch_operands = 0 : i64, tpu.core_type = #tpu.core_type<tc>, window_params = [{transform_indices = @transform_0, window_bounds = array<i64: 16, 2>}, {pipeline_mode = #tpu.pipeline_mode<synchronous>, transform_indices = @transform_1, window_bounds = array<i64: 32, 16>}, {pipeline_mode = #tpu.pipeline_mode<synchronous>, transform_indices = @transform_2, window_bounds = array<i64: 32, 32>}, {pipeline_mode = #tpu.pipeline_mode<synchronous>, transform_indices = @transform_3, window_bounds = array<i64: 8, 32>}, {pipeline_mode = #tpu.pipeline_mode<synchronous>, transform_indices = @transform_4, window_bounds = array<i64: 72, 1>}, {transform_indices = @transform_5, window_bounds = array<i64: 8, 2>}]} {
    %c0 = arith.constant 0 : index
    %c0_0 = arith.constant 0 : index
    %0 = vector.load %arg1[%c0, %c0_0] : memref<16x2xf32, #tpu.memory_space<vmem>>, vector<16x2xf32>
    %c0_1 = arith.constant 0 : index
    %c0_2 = arith.constant 0 : index
    %1 = vector.load %arg5[%c0_1, %c0_2] : memref<72x1xf32, #tpu.memory_space<vmem>>, vector<72x1xf32>
    %2 = vector.extract_strided_slice %1 {offsets = [0, 0], sizes = [32, 1], strides = [1, 1]} : vector<72x1xf32> to vector<32x1xf32>
    %3 = vector.extract_strided_slice %1 {offsets = [32, 0], sizes = [32, 1], strides = [1, 1]} : vector<72x1xf32> to vector<32x1xf32>
    %4 = vector.extract_strided_slice %1 {offsets = [64, 0], sizes = [8, 1], strides = [1, 1]} : vector<72x1xf32> to vector<8x1xf32>
    %c0_3 = arith.constant 0 : index
    %c0_4 = arith.constant 0 : index
    %5 = vector.load %arg2[%c0_3, %c0_4] : memref<32x16xf32, #tpu.memory_space<vmem>>, vector<32x16xf32>
    %cst = arith.constant dense<0.000000e+00> : vector<32x2xf32>
    %6 = tpu.matmul %5, %0, %cst {dimension_numbers = #tpu.dot_dimension_numbers<[1], [0], [0], [1], [0, 0, 1, 1], [], []>} : vector<32x16xf32>, vector<16x2xf32>, vector<32x2xf32> -> vector<32x2xf32>
    %7 = vector.broadcast %2 : vector<32x1xf32> to vector<32x2xf32>
    %8 = arith.addf %6, %7 : vector<32x2xf32>
    %9 = math.tanh %8 : vector<32x2xf32>
    %c0_5 = arith.constant 0 : index
    %c0_6 = arith.constant 0 : index
    %10 = vector.load %arg3[%c0_5, %c0_6] : memref<32x32xf32, #tpu.memory_space<vmem>>, vector<32x32xf32>
    %cst_7 = arith.constant dense<0.000000e+00> : vector<32x2xf32>
    %11 = tpu.matmul %10, %9, %cst_7 {dimension_numbers = #tpu.dot_dimension_numbers<[1], [0], [0], [1], [0, 0, 1, 1], [], []>} : vector<32x32xf32>, vector<32x2xf32>, vector<32x2xf32> -> vector<32x2xf32>
    %12 = vector.broadcast %3 : vector<32x1xf32> to vector<32x2xf32>
    %13 = arith.addf %11, %12 : vector<32x2xf32>
    %14 = math.tanh %13 : vector<32x2xf32>
    %c0_8 = arith.constant 0 : index
    %c0_9 = arith.constant 0 : index
    %15 = vector.load %arg4[%c0_8, %c0_9] : memref<8x32xf32, #tpu.memory_space<vmem>>, vector<8x32xf32>
    %cst_10 = arith.constant dense<0.000000e+00> : vector<8x2xf32>
    %16 = tpu.matmul %15, %14, %cst_10 {dimension_numbers = #tpu.dot_dimension_numbers<[1], [0], [0], [1], [0, 0, 1, 1], [], []>} : vector<8x32xf32>, vector<32x2xf32>, vector<8x2xf32> -> vector<8x2xf32>
    %17 = vector.broadcast %4 : vector<8x1xf32> to vector<8x2xf32>
    %18 = arith.addf %16, %17 : vector<8x2xf32>
    %c0_11 = arith.constant 0 : index
    %c0_12 = arith.constant 0 : index
    %19 = vector.load %arg6[%c0_11, %c0_12] : memref<8x2xf32, #tpu.memory_space<vmem>>, vector<8x2xf32>
    tpu.vector_store %arg6[%c0_11, %c0_12], %18 {strides = array<i32>} : memref<8x2xf32, #tpu.memory_space<vmem>>, vector<8x2xf32>,
    return
  }
  func.func @transform_0(%arg0: i32) -> (i32, i32) {
    %c0_i32 = arith.constant 0 : i32
    %c0_i32_0 = arith.constant 0 : i32
    return %c0_i32, %arg0 : i32, i32
  }
  func.func @transform_1(%arg0: i32) -> (i32, i32) {
    %c0_i32 = arith.constant 0 : i32
    %c0_i32_0 = arith.constant 0 : i32
    %c0_i32_1 = arith.constant 0 : i32
    return %c0_i32, %c0_i32_0 : i32, i32
  }
  func.func @transform_2(%arg0: i32) -> (i32, i32) {
    %c0_i32 = arith.constant 0 : i32
    %c0_i32_0 = arith.constant 0 : i32
    %c0_i32_1 = arith.constant 0 : i32
    return %c0_i32, %c0_i32_0 : i32, i32
  }
  func.func @transform_3(%arg0: i32) -> (i32, i32) {
    %c0_i32 = arith.constant 0 : i32
    %c0_i32_0 = arith.constant 0 : i32
    %c0_i32_1 = arith.constant 0 : i32
    return %c0_i32, %c0_i32_0 : i32, i32
  }
  func.func @transform_4(%arg0: i32) -> (i32, i32) {
    %c0_i32 = arith.constant 0 : i32
    %c0_i32_0 = arith.constant 0 : i32
    %c0_i32_1 = arith.constant 0 : i32
    return %c0_i32, %c0_i32_0 : i32, i32
  }
  func.func @transform_5(%arg0: i32) -> (i32, i32) {
    %c0_i32 = arith.constant 0 : i32
    %c0_i32_0 = arith.constant 0 : i32
    return %c0_i32, %arg0 : i32, i32
  }
}

</mosaic_0001>

<llo_original>
// kernel: mlp_policy_forward.1
$region0: #{mlp_policy_forward.1}
  #allocation0 [shape = 'u32[]', space=smem, size = 0x4, offset = 0x4, fixed_abs, tag = 'smem constant byte address 0x4 - core index']
  #allocation1 [shape = 'u32[144,128]{1,0:T(1,128)}', space=vmem, size = 0x12000, scoped, tag = 'internal scratch']
  %s0 = inlined_call_operand.vmem [shape: f32[16,2], index: 0, kind: input, shape index: {}]
  %s1 = inlined_call_operand.vmem [shape: f32[32,16], index: 1, kind: input, shape index: {}]
  %s2 = inlined_call_operand.vmem [shape: f32[32,32], index: 2, kind: input, shape index: {}]
  %s3 = inlined_call_operand.vmem [shape: f32[8,32], index: 3, kind: input, shape index: {}]
  %s4 = inlined_call_operand.vmem [shape: f32[72,1], index: 4, kind: input, shape index: {}]
  %s5 = inlined_call_operand.vmem [shape: f32[8,2], index: 5, kind: output, shape index: {}]
  %s6 = sld [smem:[#allocation0]]
  $region30: #{mlp_policy_forward.1} parent=0
    _
  %s8 = ssub.s32 1, %s6
  %s9 = scalar_select 0, %s8, %s6
  // Predicated region
  $region2: #{mlp_policy_forward.1} parent=0 // pred_check
    _
  $region3: #{mlp_policy_forward.1} parent=0 // pred_check_branch
    %11 = sbr.rel (0) target = $region5
  $region4: #{mlp_policy_forward.1} parent=0 // pred_region
    _
  $region5: #{mlp_policy_forward.1} parent=0 // pred_fallthru
    _
  // Predicated region
  $region6: #{mlp_policy_forward.1} parent=0 // pred_check
    _
  $region7: #{mlp_policy_forward.1} parent=0 // pred_check_branch
    %13 = sbr.rel (0) target = $region9
  $region8: #{mlp_policy_forward.1} parent=0 // pred_region
    _
  $region9: #{mlp_policy_forward.1} parent=0 // pred_fallthru
    _
  // Predicated region
  $region10: #{mlp_policy_forward.1} parent=0 // pred_check
    _
  $region11: #{mlp_policy_forward.1} parent=0 // pred_check_branch
    %15 = sbr.rel (0) target = $region13
  $region12: #{mlp_policy_forward.1} parent=0 // pred_region
    _
  $region13: #{mlp_policy_forward.1} parent=0 // pred_fallthru
    _
  // Predicated region
  $region14: #{mlp_policy_forward.1} parent=0 // pred_check
    _
  $region15: #{mlp_policy_forward.1} parent=0 // pred_check_branch
    %17 = sbr.rel (0) target = $region17
  $region16: #{mlp_policy_forward.1} parent=0 // pred_region
    _
  $region17: #{mlp_policy_forward.1} parent=0 // pred_fallthru
    _
  // Predicated region
  $region18: #{mlp_policy_forward.1} parent=0 // pred_check
    _
  $region19: #{mlp_policy_forward.1} parent=0 // pred_check_branch
    %19 = sbr.rel (0) target = $region21
  $region20: #{mlp_policy_forward.1} parent=0 // pred_region
    _
  $region21: #{mlp_policy_forward.1} parent=0 // pred_fallthru
    _
  %v20 = vld [vmem:[%s0] sm:$0xff]
  %v21 = vld [vmem:[%s0 + $0x8] sm:$0xff]
  %v22 = vld [vmem:[%s4] sm:$0xff]
  %v23 = vld [vmem:[%s4 + $0x8] sm:$0xff]
  %v24 = vld [vmem:[%s4 + $0x10] sm:$0xff]
  %v25 = vld [vmem:[%s4 + $0x18] sm:$0xff]
  %v26 = vld [vmem:[%s4 + $0x20] sm:$0xff]
  %v27 = vld [vmem:[%s4 + $0x28] sm:$0xff]
  %v28 = vld [vmem:[%s4 + $0x30] sm:$0xff]
  %v29 = vld [vmem:[%s4 + $0x38] sm:$0xff]
  %v30 = vld [vmem:[%s4 + $0x40] sm:$0xff]
  %v31 = vld [vmem:[%s1] sm:$0xff]
  %v32 = vld [vmem:[%s1 + $0x8] sm:$0xff]
  %v33 = vld [vmem:[%s1 + $0x10] sm:$0xff]
  %v34 = vld [vmem:[%s1 + $0x18] sm:$0xff]
  %36 = vset.pattern.permute.xlu0 0
  %37 = vperm.xlu0 %36, %v22
  %v38 = vpop.permute.xlu0 %37
  %41 = vset.pattern.permute.xlu0 0
  %42 = vperm.xlu0 %41, %v23
  %v43 = vpop.permute.xlu0 %42
  %46 = vset.pattern.permute.xlu0 0
  %47 = vperm.xlu0 %46, %v24
  %v48 = vpop.permute.xlu0 %47
  %51 = vset.pattern.permute.xlu0 0
  %52 = vperm.xlu0 %51, %v25
  %v53 = vpop.permute.xlu0 %52
  %vm55 = vcmask 130048
  %v57 = vsel %vm55, %v31, 0
  %v60 = vsel %vm55, %v32, 0
  %v63 = vsel %vm55, %v33, 0
  %v66 = vsel %vm55, %v34, 0
  %68 = vmatprep.subr.mxu0 0.0
  %69 = vmatpush1.msra.mxu0 %v20
  %70 = vmatprep.subr.mxu0 0.0
  %71 = vmatpush1.msra.mxu0 %v21
  %72 = vmatprep.subr.mxu0 0.0
  %73 = vmatpush1.msra.mxu0 0.0
  %74 = vmatprep.subr.mxu0 0.0
  %75 = vmatpush1.msra.mxu0 0.0
  %76 = vmatprep.subr.mxu0 0.0
  %77 = vmatpush1.msra.mxu0 0.0
  %78 = vmatprep.subr.mxu0 0.0
  %79 = vmatpush1.msra.mxu0 0.0
  %80 = vmatprep.subr.mxu0 0.0
  %81 = vmatpush1.msra.mxu0 0.0
  %82 = vmatprep.subr.mxu0 0.0
  %83 = vmatpush1.msra.mxu0 0.0
  %84 = vmatprep.subr.mxu0 0.0
  %85 = vmatpush1.msra.mxu0 0.0
  %86 = vmatprep.subr.mxu0 0.0
  %87 = vmatpush1.msra.mxu0 0.0
  %88 = vmatprep.subr.mxu0 0.0
  %89 = vmatpush1.msra.mxu0 0.0
  %90 = vmatprep.subr.mxu0 0.0
  %91 = vmatpush1.msra.mxu0 0.0
  %92 = vmatprep.subr.mxu0 0.0
  %93 = vmatpush1.msra.mxu0 0.0
  %94 = vmatprep.subr.mxu0 0.0
  %95 = vmatpush1.msra.mxu0 0.0
  %96 = vmatprep.subr.mxu0 0.0
  %97 = vmatpush1.msra.mxu0 0.0
  %98 = vmatprep.subr.mxu0 0.0
  %99 = vmatpush1.msra.mxu0 0.0
  %100 = vmatprep.subr.mxu0 0.0
  %101 = vmatpush1.msra.mxu0 0.0
  %102 = vmatprep.subr.mxu0 0.0
  %103 = vmatpush1.msra.mxu0 0.0
  %104 = vmatprep.subr.mxu0 0.0
  %105 = vmatpush1.msra.mxu0 0.0
  %106 = vmatprep.subr.mxu0 0.0
  %107 = vmatpush1.msra.mxu0 0.0
  %108 = vmatprep.subr.mxu0 0.0
  %109 = vmatpush1.msra.mxu0 0.0
  %110 = vmatprep.subr.mxu0 0.0
  %111 = vmatpush1.msra.mxu0 0.0
  %112 = vmatprep.subr.mxu0 0.0
  %113 = vmatpush1.msra.mxu0 0.0
  %114 = vmatprep.subr.mxu0 0.0
  %115 = vmatpush1.msra.mxu0 0.0
  %116 = vmatprep.subr.mxu0 0.0
  %117 = vmatpush1.msra.mxu0 0.0
  %118 = vmatprep.subr.mxu0 0.0
  %119 = vmatpush1.msra.mxu0 0.0
  %120 = vmatprep.subr.mxu0 0.0
  %121 = vmatpush1.msra.mxu0 0.0
  %122 = vmatprep.subr.mxu0 0.0
  %123 = vmatpush1.msra.mxu0 0.0
  %124 = vmatprep.subr.mxu0 0.0
  %125 = vmatpush1.msra.mxu0 0.0
  %126 = vmatprep.subr.mxu0 0.0
  %127 = vmatpush1.msra.mxu0 0.0
  %128 = vmatprep.subr.mxu0 0.0
  %129 = vmatpush1.msra.mxu0 0.0
  %130 = vmatprep.subr.mxu0 0.0
  %131 = vmatpush1.msra.mxu0 0.0
  %132 = vmatprep.mubr.f32.mxu0 0.0
  %133 = vmatmul.mubr.f32.gmra.mrb[0].mxu0 %v57
  %v134 = vpop.f32.mrb[0].mxu0
  %v135 = vadd.f32 %v38, %v134
  %v136 = vpop.f32.mrb[0].mxu0
  %137 = vmatprep.mubr.f32.mxu0 0.0
  %138 = vmatmul.mubr.f32.gmra.mrb[0].mxu0 %v60
  %v139 = vpop.f32.mrb[0].mxu0
  %v140 = vadd.f32 %v43, %v139
  %v141 = vpop.f32.mrb[0].mxu0
  %142 = vmatprep.mubr.f32.mxu0 0.0
  %143 = vmatmul.mubr.f32.gmra.mrb[0].mxu0 %v63
  %v144 = vpop.f32.mrb[0].mxu0
  %v145 = vadd.f32 %v48, %v144
  %v146 = vpop.f32.mrb[0].mxu0
  %147 = vmatprep.mubr.f32.mxu0 0.0
  %148 = vmatmul.mubr.f32.gmra.mrb[0].mxu0 %v66
  %v149 = vpop.f32.mrb[0].mxu0
  %v150 = vadd.f32 %v53, %v149
  %v151 = vpop.f32.mrb[0].mxu0
  %152 = vdwg.mxu0
  %v153 = vtanh.pop %v135
  %v154 = vtanh.pop %v140
  %v155 = vtanh.pop %v145
  %v156 = vtanh.pop %v150
  %v157 = vld [vmem:[%s2] sm:$0xff]
  %v158 = vld [vmem:[%s2 + $0x8] sm:$0xff]
  %v159 = vld [vmem:[%s2 + $0x10] sm:$0xff]
  %v160 = vld [vmem:[%s2 + $0x18] sm:$0xff]
  %162 = vset.pattern.permute.xlu0 0
  %163 = vperm.xlu0 %162, %v26
  %v164 = vpop.permute.xlu0 %163
  %167 = vset.pattern.permute.xlu0 0
  %168 = vperm.xlu0 %167, %v27
  %v169 = vpop.permute.xlu0 %168
  %172 = vset.pattern.permute.xlu0 0
  %173 = vperm.xlu0 %172, %v28
  %v174 = vpop.permute.xlu0 %173
  %177 = vset.pattern.permute.xlu0 0
  %178 = vperm.xlu0 %177, %v29
  %v179 = vpop.permute.xlu0 %178
  %vm181 = vcmask 261120
  %v183 = vsel %vm181, %v157, 0
  %v186 = vsel %vm181, %v158, 0
  %v189 = vsel %vm181, %v159, 0
  %v192 = vsel %vm181, %v160, 0
  %194 = vmatprep.subr.mxu0 0.0
  %195 = vmatpush1.msra.mxu0 %v153
  %196 = vmatprep.subr.mxu0 0.0
  %197 = vmatpush1.msra.mxu0 %v154
  %198 = vmatprep.subr.mxu0 0.0
  %199 = vmatpush1.msra.mxu0 %v155
  %200 = vmatprep.subr.mxu0 0.0
  %201 = vmatpush1.msra.mxu0 %v156
  %202 = vmatprep.subr.mxu0 0.0
  %203 = vmatpush1.msra.mxu0 0.0
  %204 = vmatprep.subr.mxu0 0.0
  %205 = vmatpush1.msra.mxu0 0.0
  %206 = vmatprep.subr.mxu0 0.0
  %207 = vmatpush1.msra.mxu0 0.0
  %208 = vmatprep.subr.mxu0 0.0
  %209 = vmatpush1.msra.mxu0 0.0
  %210 = vmatprep.subr.mxu0 0.0
  %211 = vmatpush1.msra.mxu0 0.0
  %212 = vmatprep.subr.mxu0 0.0
  %213 = vmatpush1.msra.mxu0 0.0
  %214 = vmatprep.subr.mxu0 0.0
  %215 = vmatpush1.msra.mxu0 0.0
  %216 = vmatprep.subr.mxu0 0.0
  %217 = vmatpush1.msra.mxu0 0.0
  %218 = vmatprep.subr.mxu0 0.0
  %219 = vmatpush1.msra.mxu0 0.0
  %220 = vmatprep.subr.mxu0 0.0
  %221 = vmatpush1.msra.mxu0 0.0
  %222 = vmatprep.subr.mxu0 0.0
  %223 = vmatpush1.msra.mxu0 0.0
  %224 = vmatprep.subr.mxu0 0.0
  %225 = vmatpush1.msra.mxu0 0.0
  %226 = vmatprep.subr.mxu0 0.0
  %227 = vmatpush1.msra.mxu0 0.0
  %228 = vmatprep.subr.mxu0 0.0
  %229 = vmatpush1.msra.mxu0 0.0
  %230 = vmatprep.subr.mxu0 0.0
  %231 = vmatpush1.msra.mxu0 0.0
  %232 = vmatprep.subr.mxu0 0.0
  %233 = vmatpush1.msra.mxu0 0.0
  %234 = vmatprep.subr.mxu0 0.0
  %235 = vmatpush1.msra.mxu0 0.0
  %236 = vmatprep.subr.mxu0 0.0
  %237 = vmatpush1.msra.mxu0 0.0
  %238 = vmatprep.subr.mxu0 0.0
  %239 = vmatpush1.msra.mxu0 0.0
  %240 = vmatprep.subr.mxu0 0.0
  %241 = vmatpush1.msra.mxu0 0.0
  %242 = vmatprep.subr.mxu0 0.0
  %243 = vmatpush1.msra.mxu0 0.0
  %244 = vmatprep.subr.mxu0 0.0
  %245 = vmatpush1.msra.mxu0 0.0
  %246 = vmatprep.subr.mxu0 0.0
  %247 = vmatpush1.msra.mxu0 0.0
  %248 = vmatprep.subr.mxu0 0.0
  %249 = vmatpush1.msra.mxu0 0.0
  %250 = vmatprep.subr.mxu0 0.0
  %251 = vmatpush1.msra.mxu0 0.0
  %252 = vmatprep.subr.mxu0 0.0
  %253 = vmatpush1.msra.mxu0 0.0
  %254 = vmatprep.subr.mxu0 0.0
  %255 = vmatpush1.msra.mxu0 0.0
  %256 = vmatprep.subr.mxu0 0.0
  %257 = vmatpush1.msra.mxu0 0.0
  %258 = vmatprep.mubr.f32.mxu0 0.0
  %259 = vmatmul.mubr.f32.gmra.mrb[0].mxu0 %v183
  %v260 = vpop.f32.mrb[0].mxu0
  %v261 = vadd.f32 %v164, %v260
  %v262 = vpop.f32.mrb[0].mxu0
  %263 = vmatprep.mubr.f32.mxu0 0.0
  %264 = vmatmul.mubr.f32.gmra.mrb[0].mxu0 %v186
  %v265 = vpop.f32.mrb[0].mxu0
  %v266 = vadd.f32 %v169, %v265
  %v267 = vpop.f32.mrb[0].mxu0
  %268 = vmatprep.mubr.f32.mxu0 0.0
  %269 = vmatmul.mubr.f32.gmra.mrb[0].mxu0 %v189
  %v270 = vpop.f32.mrb[0].mxu0
  %v271 = vadd.f32 %v174, %v270
  %v272 = vpop.f32.mrb[0].mxu0
  %273 = vmatprep.mubr.f32.mxu0 0.0
  %274 = vmatmul.mubr.f32.gmra.mrb[0].mxu0 %v192
  %v275 = vpop.f32.mrb[0].mxu0
  %v276 = vadd.f32 %v179, %v275
  %v277 = vpop.f32.mrb[0].mxu0
  %278 = vdwg.mxu0
  %v279 = vtanh.pop %v261
  %v280 = vtanh.pop %v266
  %v281 = vtanh.pop %v271
  %v282 = vtanh.pop %v276
  %v283 = vld [vmem:[%s3] sm:$0xff]
  %285 = vset.pattern.permute.xlu0 0
  %286 = vperm.xlu0 %285, %v30
  %v287 = vpop.permute.xlu0 %286
  %v290 = vsel %vm181, %v283, 0
  %292 = vmatprep.subr.mxu0 0.0
  %293 = vmatpush1.msra.mxu0 %v279
  %294 = vmatprep.subr.mxu0 0.0
  %295 = vmatpush1.msra.mxu0 %v280
  %296 = vmatprep.subr.mxu0 0.0
  %297 = vmatpush1.msra.mxu0 %v281
  %298 = vmatprep.subr.mxu0 0.0
  %299 = vmatpush1.msra.mxu0 %v282
  %300 = vmatprep.subr.mxu0 0.0
  %301 = vmatpush1.msra.mxu0 0.0
  %302 = vmatprep.subr.mxu0 0.0
  %303 = vmatpush1.msra.mxu0 0.0
  %304 = vmatprep.subr.mxu0 0.0
  %305 = vmatpush1.msra.mxu0 0.0
  %306 = vmatprep.subr.mxu0 0.0
  %307 = vmatpush1.msra.mxu0 0.0
  %308 = vmatprep.subr.mxu0 0.0
  %309 = vmatpush1.msra.mxu0 0.0
  %310 = vmatprep.subr.mxu0 0.0
  %311 = vmatpush1.msra.mxu0 0.0
  %312 = vmatprep.subr.mxu0 0.0
  %313 = vmatpush1.msra.mxu0 0.0
  %314 = vmatprep.subr.mxu0 0.0
  %315 = vmatpush1.msra.mxu0 0.0
  %316 = vmatprep.subr.mxu0 0.0
  %317 = vmatpush1.msra.mxu0 0.0
  %318 = vmatprep.subr.mxu0 0.0
  %319 = vmatpush1.msra.mxu0 0.0
  %320 = vmatprep.subr.mxu0 0.0
  %321 = vmatpush1.msra.mxu0 0.0
  %322 = vmatprep.subr.mxu0 0.0
  %323 = vmatpush1.msra.mxu0 0.0
  %324 = vmatprep.subr.mxu0 0.0
  %325 = vmatpush1.msra.mxu0 0.0
  %326 = vmatprep.subr.mxu0 0.0
  %327 = vmatpush1.msra.mxu0 0.0
  %328 = vmatprep.subr.mxu0 0.0
  %329 = vmatpush1.msra.mxu0 0.0
  %330 = vmatprep.subr.mxu0 0.0
  %331 = vmatpush1.msra.mxu0 0.0
  %332 = vmatprep.subr.mxu0 0.0
  %333 = vmatpush1.msra.mxu0 0.0
  %334 = vmatprep.subr.mxu0 0.0
  %335 = vmatpush1.msra.mxu0 0.0
  %336 = vmatprep.subr.mxu0 0.0
  %337 = vmatpush1.msra.mxu0 0.0
  %338 = vmatprep.subr.mxu0 0.0
  %339 = vmatpush1.msra.mxu0 0.0
  %340 = vmatprep.subr.mxu0 0.0
  %341 = vmatpush1.msra.mxu0 0.0
  %342 = vmatprep.subr.mxu0 0.0
  %343 = vmatpush1.msra.mxu0 0.0
  %344 = vmatprep.subr.mxu0 0.0
  %345 = vmatpush1.msra.mxu0 0.0
  %346 = vmatprep.subr.mxu0 0.0
  %347 = vmatpush1.msra.mxu0 0.0
  %348 = vmatprep.subr.mxu0 0.0
  %349 = vmatpush1.msra.mxu0 0.0
  %350 = vmatprep.subr.mxu0 0.0
  %351 = vmatpush1.msra.mxu0 0.0
  %352 = vmatprep.subr.mxu0 0.0
  %353 = vmatpush1.msra.mxu0 0.0
  %354 = vmatprep.subr.mxu0 0.0
  %355 = vmatpush1.msra.mxu0 0.0
  %356 = vmatprep.mubr.f32.mxu0 0.0
  %357 = vmatmul.mubr.f32.gmra.mrb[0].mxu0 %v290
  %v358 = vpop.f32.mrb[0].mxu0
  %v359 = vadd.f32 %v287, %v358
  %v360 = vpop.f32.mrb[0].mxu0
  %361 = vdwg.mxu0
  %vm362 = vcmask 15360
  %363 = vst.msk [vmem:[%s5] sm:$0xff] %vm362, %v359
  // Predicated region
  $region22: #{mlp_policy_forward.1} parent=0 // pred_check
    _
  $region23: #{mlp_policy_forward.1} parent=0 // pred_check_branch
    %365 = sbr.rel (0) target = $region25
  $region24: #{mlp_policy_forward.1} parent=0 // pred_region
    _
  $region25: #{mlp_policy_forward.1} parent=0 // pred_fallthru
    _
  // Predicated region
  $region26: #{mlp_policy_forward.1} parent=0 // pred_check
    _
  $region27: #{mlp_policy_forward.1} parent=0 // pred_check_branch
    %367 = sbr.rel (0) target = $region29
  $region28: #{mlp_policy_forward.1} parent=0 // pred_region
    _
  $region29: #{mlp_policy_forward.1} parent=0 // pred_fallthru
    _

</llo_original>
